<compile_context>
chip_gen: v6e
topology: v6e:2x2x1
jax: 0.10.0
libtpu: 0.0.40
codegen_flags: <defaults>
</compile_context>

<pallas_src>
import functools

import jax
import jax.numpy as jnp
from jax.experimental import pallas as pl
from jax.experimental.pallas import tpu as pltpu

HIDDEN = 200
LANE = 128
_TB_MAX = 2048  # batch (lane) tile cap; multiple of 128, VMEM-safe on v5e/v6e/v7x


def _round_up(x, m):
    return ((x + m - 1) // m) * m


def _softplus(x):
    # Numerically-stable softplus: log(1 + exp(x)) = max(x, 0) + log1p(exp(-|x|))
    return jnp.maximum(x, 0.0) + jnp.log1p(jnp.exp(-jnp.abs(x)))


@functools.lru_cache(maxsize=1)
def _bf16_act_supported():
    # bf16 EUP exists on v6e (Trillium) and v7x; keep f32 softplus on v5e and older.
    try:
        kind = jax.devices()[0].device_kind.lower()
    except Exception:
        return False
    return ("v6" in kind) or ("v7" in kind)


def mlp_kernel(x_ref, w1_ref, b1_ref, w2_ref, b2_ref, o_ref, *, use_bf16_act):
    # Feature-major layout (batch on the 128-lane axis):
    #   x_ref : [C_in,  TB]    f32  (pipelined over the batch grid)
    #   w1_ref: [H_pad, C_in]  f32  (resident across grid steps)
    #   b1_ref: [H_pad, 1]     f32  (resident)
    #   w2_ref: [C_out, H_pad] bf16 (resident)
    #   b2_ref: [C_out, 1]     f32  (resident)
    #   o_ref : [C_out, TB]    f32
    x = x_ref[...]
    w1 = w1_ref[...]
    c_in = x.shape[0]

    # Layer 1: K = C_in (=2) is far too small for the MXU; do rank-1 broadcast
    # FMAs on the VPU in f32 (more accurate, frees MXU pushes for layer 2).
    h = w1[:, 0:1] * x[0:1, :]
    for c in range(1, c_in):
        h = h + w1[:, c:c + 1] * x[c:c + 1, :]
    h = h + b1_ref[...]

    # Softplus on the hidden layer; bf16 EUP path on v6e/v7x, f32 on v5e.
    if use_bf16_act:
        h = _softplus(h.astype(jnp.bfloat16))
    else:
        h = _softplus(h).astype(jnp.bfloat16)

    # Dropout(p=0) is the identity in both train and eval -> no-op.

    # Layer 2 on the MXU: bf16 operands, f32 accumulation.
    y = jnp.dot(w2_ref[...], h, preferred_element_type=jnp.float32)
    y = y + b2_ref[...]                      # [C_out, 1] broadcast bias add
    o_ref[...] = _softplus(y).astype(o_ref.dtype)


def pack_params(w1, b1, w2, b2):
    """Pre-pack parameters into kernel layouts (call once, reuse across forwards).

    w1: [C_in, H]   b1: [H] or [1, H]
    w2: [H, C_out]  b2: [C_out] or [1, C_out]
    """
    C_in, H = w1.shape
    H2, C_out = w2.shape
    assert H == H2
    H_pad = _round_up(max(H, 16), 16)        # 200 -> 208 (clean bf16 sublane packing)

    w1t = jnp.zeros((H_pad, C_in), jnp.float32).at[:H, :].set(
        jnp.asarray(w1, jnp.float32).T)
    b1c = jnp.zeros((H_pad, 1), jnp.float32).at[:H, 0].set(
        jnp.asarray(b1, jnp.float32).reshape(-1))
    # Zero-padded W2^T columns multiply the softplus(0)=log2 pad rows exactly to zero.
    w2t = jnp.zeros((C_out, H_pad), jnp.float32).at[:, :H].set(
        jnp.asarray(w2, jnp.float32).T).astype(jnp.bfloat16)
    b2c = jnp.asarray(b2, jnp.float32).reshape(C_out, 1)
    return w1t, b1c, w2t, b2c


@functools.partial(jax.jit, static_argnames=("use_bf16_act",))
def _mlp_forward_impl(x, w1t, b1c, w2t, b2c, *, use_bf16_act):
    B, C_in = x.shape
    H_pad = w1t.shape[0]
    C_out = w2t.shape[0]

    # Batch rides the lane axis.  Pick the tile so it is (a) lane-aligned,
    # (b) big enough to amortize per-grid-step overhead, and (c) yields >=2
    # grid steps when B allows, so "parallel" shards across both v7x TCs.
    B_ceil = _round_up(B, LANE)
    TB = max(LANE, min(_TB_MAX, _round_up(-(-B_ceil // 2), LANE)))
    B_pad = _round_up(B_ceil, TB)

    xt = jnp.zeros((C_in, B_pad), jnp.float32).at[:, :B].set(x.T.astype(jnp.float32))

    kernel = functools.partial(mlp_kernel, use_bf16_act=use_bf16_act)
    out = pl.pallas_call(
        kernel,
        out_shape=jax.ShapeDtypeStruct((C_out, B_pad), jnp.float32),
        grid_spec=pl.GridSpec(
            grid=(B_pad // TB,),
            in_specs=[
                pl.BlockSpec((C_in, TB), lambda i: (0, i)),         # x tile (pipelined)
                pl.BlockSpec((H_pad, C_in), lambda i: (0, 0)),      # W1^T   (resident)
                pl.BlockSpec((H_pad, 1), lambda i: (0, 0)),         # b1     (resident)
                pl.BlockSpec((C_out, H_pad), lambda i: (0, 0)),     # W2^T   (resident)
                pl.BlockSpec((C_out, 1), lambda i: (0, 0)),         # b2     (resident)
            ],
            out_specs=pl.BlockSpec((C_out, TB), lambda i: (0, i)),  # lane-dense output
        ),
        compiler_params=pltpu.CompilerParams(
            dimension_semantics=("parallel",)),   # shards batch grid across TCs (v7x)
    )(xt, w1t, b1c, w2t, b2c)

    return out[:, :B].T                            # back to [B, C_out]


def mlp_forward(x, packed_params):
    """Forward pass of the `mlp` module; packed_params from pack_params()."""
    use_bf16 = _bf16_act_supported()
    try:
        return _mlp_forward_impl(x, *packed_params, use_bf16_act=use_bf16)
    except Exception:
        if not use_bf16:
            raise
        # Defensive fallback if bf16 transcendentals fail to lower on this chip.
        return _mlp_forward_impl(x, *packed_params, use_bf16_act=False)


def init_params(key, input_channels=2, output_channels=1, hidden=HIDDEN):
    # Deterministic init mimicking torch.nn.Linear: U(-1/sqrt(fan_in), 1/sqrt(fan_in)).
    k1, k2, k3, k4 = jax.random.split(key, 4)
    bound1 = 1.0 / jnp.sqrt(float(input_channels))
    bound2 = 1.0 / jnp.sqrt(float(hidden))
    # Stored as [fan_in, fan_out] (pre-transposed vs. torch's [out, in]).
    w1 = jax.random.uniform(k1, (input_channels, hidden), jnp.float32, -bound1, bound1)
    b1 = jax.random.uniform(k2, (1, hidden), jnp.float32, -bound1, bound1)
    w2 = jax.random.uniform(k3, (hidden, output_channels), jnp.float32, -bound2, bound2)
    b2 = jax.random.uniform(k4, (1, output_channels), jnp.float32, -bound2, bound2)
    return w1, b1, w2, b2


if __name__ == "__main__":
    key = jax.random.PRNGKey(0)
    kx, kp = jax.random.split(key)

    B, C_in, C_out = 8, 2, 1
    x = jax.random.normal(kx, (B, C_in), dtype=jnp.float32)
    w1, b1, w2, b2 = init_params(kp, input_channels=C_in, output_channels=C_out)
    packed = pack_params(w1, b1, w2, b2)

    out = jax.block_until_ready(mlp_forward(x, packed))

    # Pure-JAX f32 reference; tolerance covers bf16 layer-2 operands / bf16 softplus.
    ref = jax.nn.softplus(jax.nn.softplus(x @ w1 + b1) @ w2 + b2)
    assert out.shape == (B, C_out)
    assert jnp.allclose(out, ref, atol=3e-2, rtol=3e-2), float(jnp.max(jnp.abs(out - ref)))

    # Second check exercising a multi-tile batch grid (>=2 steps, padded last tile).
    B2 = 1000
    x2 = jax.random.normal(jax.random.PRNGKey(1), (B2, C_in), dtype=jnp.float32)
    out2 = jax.block_until_ready(mlp_forward(x2, packed))
    ref2 = jax.nn.softplus(jax.nn.softplus(x2 @ w1 + b1) @ w2 + b2)
    assert out2.shape == (B2, C_out)
    assert jnp.allclose(out2, ref2, atol=3e-2, rtol=3e-2), float(jnp.max(jnp.abs(out2 - ref2)))

    print("KERNEL_OK")
</pallas_src>

<mosaic_0001>
module attributes {stable_mosaic.version = 11 : i64} {
  func.func @mlp_kernel(%arg0: i32, %arg1: memref<2x128xf32, #tpu.memory_space<vmem>>, %arg2: memref<208x2xf32, #tpu.memory_space<vmem>>, %arg3: memref<208x1xf32, #tpu.memory_space<vmem>>, %arg4: memref<1x208xbf16, #tpu.memory_space<vmem>>, %arg5: memref<1x1xf32, #tpu.memory_space<vmem>>, %arg6: memref<1x128xf32, #tpu.memory_space<vmem>>) attributes {dimension_semantics = [#tpu.dimension_semantics<parallel>], iteration_bounds = array<i64: 1>, scalar_prefetch = 0 : i64, scratch_operands = 0 : i64, tpu.core_type = #tpu.core_type<tc>, window_params = [{transform_indices = @transform_0, window_bounds = array<i64: 2, 128>}, {pipeline_mode = #tpu.pipeline_mode<synchronous>, transform_indices = @transform_1, window_bounds = array<i64: 208, 2>}, {pipeline_mode = #tpu.pipeline_mode<synchronous>, transform_indices = @transform_2, window_bounds = array<i64: 208, 1>}, {pipeline_mode = #tpu.pipeline_mode<synchronous>, transform_indices = @transform_3, window_bounds = array<i64: 1, 208>}, {pipeline_mode = #tpu.pipeline_mode<synchronous>, transform_indices = @transform_4, window_bounds = array<i64: 1, 1>}, {transform_indices = @transform_5, window_bounds = array<i64: 1, 128>}]} {
    %c0 = arith.constant 0 : index
    %c0_0 = arith.constant 0 : index
    %0 = vector.load %arg1[%c0, %c0_0] : memref<2x128xf32, #tpu.memory_space<vmem>>, vector<2x128xf32>
    %c0_1 = arith.constant 0 : index
    %c0_2 = arith.constant 0 : index
    %1 = vector.load %arg2[%c0_1, %c0_2] : memref<208x2xf32, #tpu.memory_space<vmem>>, vector<208x2xf32>
    %2 = vector.extract_strided_slice %1 {offsets = [0, 0], sizes = [208, 1], strides = [1, 1]} : vector<208x2xf32> to vector<208x1xf32>
    %3 = vector.extract_strided_slice %0 {offsets = [0, 0], sizes = [1, 128], strides = [1, 1]} : vector<2x128xf32> to vector<1x128xf32>
    %4 = vector.broadcast %2 : vector<208x1xf32> to vector<208x128xf32>
    %5 = vector.broadcast %3 : vector<1x128xf32> to vector<208x128xf32>
    %6 = arith.mulf %4, %5 : vector<208x128xf32>
    %7 = vector.extract_strided_slice %1 {offsets = [0, 1], sizes = [208, 1], strides = [1, 1]} : vector<208x2xf32> to vector<208x1xf32>
    %8 = vector.extract_strided_slice %0 {offsets = [1, 0], sizes = [1, 128], strides = [1, 1]} : vector<2x128xf32> to vector<1x128xf32>
    %9 = vector.broadcast %7 : vector<208x1xf32> to vector<208x128xf32>
    %10 = vector.broadcast %8 : vector<1x128xf32> to vector<208x128xf32>
    %11 = arith.mulf %9, %10 : vector<208x128xf32>
    %12 = arith.addf %6, %11 : vector<208x128xf32>
    %c0_3 = arith.constant 0 : index
    %c0_4 = arith.constant 0 : index
    %13 = vector.load %arg3[%c0_3, %c0_4] : memref<208x1xf32, #tpu.memory_space<vmem>>, vector<208x1xf32>
    %14 = vector.broadcast %13 : vector<208x1xf32> to vector<208x128xf32>
    %15 = arith.addf %12, %14 : vector<208x128xf32>
    %cst = arith.constant 0.000000e+00 : f32
    %16 = vector.broadcast %cst : f32 to vector<208x128xf32>
    %17 = arith.maximumf %15, %16 : vector<208x128xf32>
    %18 = math.absf %15 : vector<208x128xf32>
    %cst_5 = arith.constant 0.000000e+00 : f32
    %19 = vector.broadcast %cst_5 : f32 to vector<208x128xf32>
    %20 = arith.subf %19, %18 : vector<208x128xf32>
    %21 = math.exp %20 : vector<208x128xf32>
    %22 = math.log1p %21 : vector<208x128xf32>
    %23 = arith.addf %17, %22 : vector<208x128xf32>
    %24 = arith.truncf %23 : vector<208x128xf32> to vector<208x128xbf16>
    %c0_6 = arith.constant 0 : index
    %c0_7 = arith.constant 0 : index
    %25 = vector.load %arg4[%c0_6, %c0_7] : memref<1x208xbf16, #tpu.memory_space<vmem>>, vector<1x208xbf16>
    %cst_8 = arith.constant dense<0.000000e+00> : vector<1x128xf32>
    %26 = tpu.matmul %25, %24, %cst_8 {dimension_numbers = #tpu.dot_dimension_numbers<[1], [0], [0], [1], [0, 0, 1, 1], [], []>} : vector<1x208xbf16>, vector<208x128xbf16>, vector<1x128xf32> -> vector<1x128xf32>
    %c0_9 = arith.constant 0 : index
    %c0_10 = arith.constant 0 : index
    %27 = vector.load %arg5[%c0_9, %c0_10] : memref<1x1xf32, #tpu.memory_space<vmem>>, vector<1x1xf32>
    %28 = vector.broadcast %27 : vector<1x1xf32> to vector<1x128xf32>
    %29 = arith.addf %26, %28 : vector<1x128xf32>
    %cst_11 = arith.constant 0.000000e+00 : f32
    %30 = vector.broadcast %cst_11 : f32 to vector<1x128xf32>
    %31 = arith.maximumf %29, %30 : vector<1x128xf32>
    %32 = math.absf %29 : vector<1x128xf32>
    %cst_12 = arith.constant 0.000000e+00 : f32
    %33 = vector.broadcast %cst_12 : f32 to vector<1x128xf32>
    %34 = arith.subf %33, %32 : vector<1x128xf32>
    %35 = math.exp %34 : vector<1x128xf32>
    %36 = math.log1p %35 : vector<1x128xf32>
    %37 = arith.addf %31, %36 : vector<1x128xf32>
    %c0_13 = arith.constant 0 : index
    %c0_14 = arith.constant 0 : index
    %38 = vector.load %arg6[%c0_13, %c0_14] : memref<1x128xf32, #tpu.memory_space<vmem>>, vector<1x128xf32>
    tpu.vector_store %arg6[%c0_13, %c0_14], %37 {strides = array<i32>} : memref<1x128xf32, #tpu.memory_space<vmem>>, vector<1x128xf32>,
    return
  }
  func.func @transform_0(%arg0: i32) -> (i32, i32) {
    %c0_i32 = arith.constant 0 : i32
    %c0_i32_0 = arith.constant 0 : i32
    return %c0_i32, %arg0 : i32, i32
  }
  func.func @transform_1(%arg0: i32) -> (i32, i32) {
    %c0_i32 = arith.constant 0 : i32
    %c0_i32_0 = arith.constant 0 : i32
    %c0_i32_1 = arith.constant 0 : i32
    return %c0_i32, %c0_i32_0 : i32, i32
  }
  func.func @transform_2(%arg0: i32) -> (i32, i32) {
    %c0_i32 = arith.constant 0 : i32
    %c0_i32_0 = arith.constant 0 : i32
    %c0_i32_1 = arith.constant 0 : i32
    return %c0_i32, %c0_i32_0 : i32, i32
  }
  func.func @transform_3(%arg0: i32) -> (i32, i32) {
    %c0_i32 = arith.constant 0 : i32
    %c0_i32_0 = arith.constant 0 : i32
    %c0_i32_1 = arith.constant 0 : i32
    return %c0_i32, %c0_i32_0 : i32, i32
  }
  func.func @transform_4(%arg0: i32) -> (i32, i32) {
    %c0_i32 = arith.constant 0 : i32
    %c0_i32_0 = arith.constant 0 : i32
    %c0_i32_1 = arith.constant 0 : i32
    return %c0_i32, %c0_i32_0 : i32, i32
  }
  func.func @transform_5(%arg0: i32) -> (i32, i32) {
    %c0_i32 = arith.constant 0 : i32
    %c0_i32_0 = arith.constant 0 : i32
    return %c0_i32, %arg0 : i32, i32
  }
}

</mosaic_0001>

<llo_original>
// kernel: _mlp_forward_impl.1
$region0: #{_mlp_forward_impl.1}
  #allocation0 [shape = 'u32[]', space=smem, size = 0x4, offset = 0x4, fixed_abs, tag = 'smem constant byte address 0x4 - core index']
  #allocation1 [shape = 'u32[144,128]{1,0:T(1,128)}', space=vmem, size = 0x12000, scoped, tag = 'internal scratch']
  #allocation2 [shape = 'f32[1,1]{1,0:T(1,128)S(1)}', space=vmem, size = 0x200, scoped, tag = 'scoped memory for _mlp_forward_impl.1']
  %s0 = inlined_call_operand.vmem [shape: f32[2,128], index: 0, kind: input, shape index: {}]
  %s1 = inlined_call_operand.vmem [shape: f32[208,2], index: 1, kind: input, shape index: {}]
  %s2 = inlined_call_operand.vmem [shape: f32[208,1], index: 2, kind: input, shape index: {}]
  %s3 = inlined_call_operand.vmem [shape: bf16[1,208], index: 3, kind: input, shape index: {}]
  %s4 = inlined_call_operand.<no memory space> [shape: f32[1,1], index: 4, kind: input, shape index: {}]
  %s5 = inlined_call_operand.vmem [shape: f32[1,128], index: 5, kind: output, shape index: {}]
  %s6 = sld [smem:[#allocation0]]
  $region30: #{_mlp_forward_impl.1} parent=0
    _
  %s8 = ssub.s32 1, %s6
  %s9 = scalar_select 0, %s8, %s6
  %v10 = vstv %s4
  %11 = vst [vmem:[#allocation2] sm:$0x1] %v10
  // Predicated region
  $region2: #{_mlp_forward_impl.1} parent=0 // pred_check
    _
  $region3: #{_mlp_forward_impl.1} parent=0 // pred_check_branch
    %13 = sbr.rel (0) target = $region5
  $region4: #{_mlp_forward_impl.1} parent=0 // pred_region
    _
  $region5: #{_mlp_forward_impl.1} parent=0 // pred_fallthru
    _
  // Predicated region
  $region6: #{_mlp_forward_impl.1} parent=0 // pred_check
    _
  $region7: #{_mlp_forward_impl.1} parent=0 // pred_check_branch
    %15 = sbr.rel (0) target = $region9
  $region8: #{_mlp_forward_impl.1} parent=0 // pred_region
    _
  $region9: #{_mlp_forward_impl.1} parent=0 // pred_fallthru
    _
  // Predicated region
  $region10: #{_mlp_forward_impl.1} parent=0 // pred_check
    _
  $region11: #{_mlp_forward_impl.1} parent=0 // pred_check_branch
    %17 = sbr.rel (0) target = $region13
  $region12: #{_mlp_forward_impl.1} parent=0 // pred_region
    _
  $region13: #{_mlp_forward_impl.1} parent=0 // pred_fallthru
    _
  // Predicated region
  $region14: #{_mlp_forward_impl.1} parent=0 // pred_check
    _
  $region15: #{_mlp_forward_impl.1} parent=0 // pred_check_branch
    %19 = sbr.rel (0) target = $region17
  $region16: #{_mlp_forward_impl.1} parent=0 // pred_region
    _
  $region17: #{_mlp_forward_impl.1} parent=0 // pred_fallthru
    _
  // Predicated region
  $region18: #{_mlp_forward_impl.1} parent=0 // pred_check
    _
  $region19: #{_mlp_forward_impl.1} parent=0 // pred_check_branch
    %21 = sbr.rel (0) target = $region21
  $region20: #{_mlp_forward_impl.1} parent=0 // pred_region
    _
  $region21: #{_mlp_forward_impl.1} parent=0 // pred_fallthru
    _
  %v23 = vld [vmem:[%s0] sm:$0x3]
  %v24 = vld [vmem:[%s1] sm:$0xff]
  %v25 = vld [vmem:[%s1 + $0x8] sm:$0xff]
  %v26 = vld [vmem:[%s1 + $0x10] sm:$0xff]
  %v27 = vld [vmem:[%s1 + $0x18] sm:$0xff]
  %v28 = vld [vmem:[%s1 + $0x20] sm:$0xff]
  %v29 = vld [vmem:[%s1 + $0x28] sm:$0xff]
  %v30 = vld [vmem:[%s1 + $0x30] sm:$0xff]
  %v31 = vld [vmem:[%s1 + $0x38] sm:$0xff]
  %v32 = vld [vmem:[%s1 + $0x40] sm:$0xff]
  %v33 = vld [vmem:[%s1 + $0x48] sm:$0xff]
  %v34 = vld [vmem:[%s1 + $0x50] sm:$0xff]
  %v35 = vld [vmem:[%s1 + $0x58] sm:$0xff]
  %v36 = vld [vmem:[%s1 + $0x60] sm:$0xff]
  %v37 = vld [vmem:[%s1 + $0x68] sm:$0xff]
  %v38 = vld [vmem:[%s1 + $0x70] sm:$0xff]
  %v39 = vld [vmem:[%s1 + $0x78] sm:$0xff]
  %v40 = vld [vmem:[%s1 + $0x80] sm:$0xff]
  %v41 = vld [vmem:[%s1 + $0x88] sm:$0xff]
  %v42 = vld [vmem:[%s1 + $0x90] sm:$0xff]
  %v43 = vld [vmem:[%s1 + $0x98] sm:$0xff]
  %v44 = vld [vmem:[%s1 + $0xa0] sm:$0xff]
  %v45 = vld [vmem:[%s1 + $0xa8] sm:$0xff]
  %v46 = vld [vmem:[%s1 + $0xb0] sm:$0xff]
  %v47 = vld [vmem:[%s1 + $0xb8] sm:$0xff]
  %v48 = vld [vmem:[%s1 + $0xc0] sm:$0xff]
  %v49 = vld [vmem:[%s1 + $0xc8] sm:$0xff]
  %51 = vset.pattern.permute.xlu0 0
  %52 = vperm.xlu0 %51, %v24
  %v53 = vpop.permute.xlu0 %52
  %56 = vset.pattern.permute.xlu0 0
  %57 = vperm.xlu0 %56, %v25
  %v58 = vpop.permute.xlu0 %57
  %61 = vset.pattern.permute.xlu0 0
  %62 = vperm.xlu0 %61, %v26
  %v63 = vpop.permute.xlu0 %62
  %66 = vset.pattern.permute.xlu0 0
  %67 = vperm.xlu0 %66, %v27
  %v68 = vpop.permute.xlu0 %67
  %71 = vset.pattern.permute.xlu0 0
  %72 = vperm.xlu0 %71, %v28
  %v73 = vpop.permute.xlu0 %72
  %76 = vset.pattern.permute.xlu0 0
  %77 = vperm.xlu0 %76, %v29
  %v78 = vpop.permute.xlu0 %77
  %81 = vset.pattern.permute.xlu0 0
  %82 = vperm.xlu0 %81, %v30
  %v83 = vpop.permute.xlu0 %82
  %86 = vset.pattern.permute.xlu0 0
  %87 = vperm.xlu0 %86, %v31
  %v88 = vpop.permute.xlu0 %87
  %91 = vset.pattern.permute.xlu0 0
  %92 = vperm.xlu0 %91, %v32
  %v93 = vpop.permute.xlu0 %92
  %96 = vset.pattern.permute.xlu0 0
  %97 = vperm.xlu0 %96, %v33
  %v98 = vpop.permute.xlu0 %97
  %101 = vset.pattern.permute.xlu0 0
  %102 = vperm.xlu0 %101, %v34
  %v103 = vpop.permute.xlu0 %102
  %106 = vset.pattern.permute.xlu0 0
  %107 = vperm.xlu0 %106, %v35
  %v108 = vpop.permute.xlu0 %107
  %111 = vset.pattern.permute.xlu0 0
  %112 = vperm.xlu0 %111, %v36
  %v113 = vpop.permute.xlu0 %112
  %116 = vset.pattern.permute.xlu0 0
  %117 = vperm.xlu0 %116, %v37
  %v118 = vpop.permute.xlu0 %117
  %121 = vset.pattern.permute.xlu0 0
  %122 = vperm.xlu0 %121, %v38
  %v123 = vpop.permute.xlu0 %122
  %126 = vset.pattern.permute.xlu0 0
  %127 = vperm.xlu0 %126, %v39
  %v128 = vpop.permute.xlu0 %127
  %131 = vset.pattern.permute.xlu0 0
  %132 = vperm.xlu0 %131, %v40
  %v133 = vpop.permute.xlu0 %132
  %136 = vset.pattern.permute.xlu0 0
  %137 = vperm.xlu0 %136, %v41
  %v138 = vpop.permute.xlu0 %137
  %141 = vset.pattern.permute.xlu0 0
  %142 = vperm.xlu0 %141, %v42
  %v143 = vpop.permute.xlu0 %142
  %146 = vset.pattern.permute.xlu0 0
  %147 = vperm.xlu0 %146, %v43
  %v148 = vpop.permute.xlu0 %147
  %151 = vset.pattern.permute.xlu0 0
  %152 = vperm.xlu0 %151, %v44
  %v153 = vpop.permute.xlu0 %152
  %156 = vset.pattern.permute.xlu0 0
  %157 = vperm.xlu0 %156, %v45
  %v158 = vpop.permute.xlu0 %157
  %161 = vset.pattern.permute.xlu0 0
  %162 = vperm.xlu0 %161, %v46
  %v163 = vpop.permute.xlu0 %162
  %166 = vset.pattern.permute.xlu0 0
  %167 = vperm.xlu0 %166, %v47
  %v168 = vpop.permute.xlu0 %167
  %171 = vset.pattern.permute.xlu0 0
  %172 = vperm.xlu0 %171, %v48
  %v173 = vpop.permute.xlu0 %172
  %176 = vset.pattern.permute.xlu0 0
  %177 = vperm.xlu0 %176, %v49
  %v178 = vpop.permute.xlu0 %177
  %v180 = vlaneseq
  %v181 = vshrl.u32 %v180, 7
  %v182 = vsub.s32 0, %v181
  %v183 = vrot.slane %v23, %v182
  %v184 = vmul.f32 %v53, %v183
  %v185 = vmul.f32 %v58, %v183
  %v186 = vmul.f32 %v63, %v183
  %v187 = vmul.f32 %v68, %v183
  %v188 = vmul.f32 %v73, %v183
  %v189 = vmul.f32 %v78, %v183
  %v190 = vmul.f32 %v83, %v183
  %v191 = vmul.f32 %v88, %v183
  %v192 = vmul.f32 %v93, %v183
  %v193 = vmul.f32 %v98, %v183
  %v194 = vmul.f32 %v103, %v183
  %v195 = vmul.f32 %v108, %v183
  %v196 = vmul.f32 %v113, %v183
  %v197 = vmul.f32 %v118, %v183
  %v198 = vmul.f32 %v123, %v183
  %v199 = vmul.f32 %v128, %v183
  %v200 = vmul.f32 %v133, %v183
  %v201 = vmul.f32 %v138, %v183
  %v202 = vmul.f32 %v143, %v183
  %v203 = vmul.f32 %v148, %v183
  %v204 = vmul.f32 %v153, %v183
  %v205 = vmul.f32 %v158, %v183
  %v206 = vmul.f32 %v163, %v183
  %v207 = vmul.f32 %v168, %v183
  %v208 = vmul.f32 %v173, %v183
  %v209 = vmul.f32 %v178, %v183
  %210 = vset.pattern.permute.xlu0 1
  %211 = vperm.xlu0 %210, %v24
  %v212 = vpop.permute.xlu0 %211
  %214 = vset.pattern.permute.xlu0 1
  %215 = vperm.xlu0 %214, %v25
  %v216 = vpop.permute.xlu0 %215
  %218 = vset.pattern.permute.xlu0 1
  %219 = vperm.xlu0 %218, %v26
  %v220 = vpop.permute.xlu0 %219
  %222 = vset.pattern.permute.xlu0 1
  %223 = vperm.xlu0 %222, %v27
  %v224 = vpop.permute.xlu0 %223
  %226 = vset.pattern.permute.xlu0 1
  %227 = vperm.xlu0 %226, %v28
  %v228 = vpop.permute.xlu0 %227
  %230 = vset.pattern.permute.xlu0 1
  %231 = vperm.xlu0 %230, %v29
  %v232 = vpop.permute.xlu0 %231
  %234 = vset.pattern.permute.xlu0 1
  %235 = vperm.xlu0 %234, %v30
  %v236 = vpop.permute.xlu0 %235
  %238 = vset.pattern.permute.xlu0 1
  %239 = vperm.xlu0 %238, %v31
  %v240 = vpop.permute.xlu0 %239
  %242 = vset.pattern.permute.xlu0 1
  %243 = vperm.xlu0 %242, %v32
  %v244 = vpop.permute.xlu0 %243
  %246 = vset.pattern.permute.xlu0 1
  %247 = vperm.xlu0 %246, %v33
  %v248 = vpop.permute.xlu0 %247
  %250 = vset.pattern.permute.xlu0 1
  %251 = vperm.xlu0 %250, %v34
  %v252 = vpop.permute.xlu0 %251
  %254 = vset.pattern.permute.xlu0 1
  %255 = vperm.xlu0 %254, %v35
  %v256 = vpop.permute.xlu0 %255
  %258 = vset.pattern.permute.xlu0 1
  %259 = vperm.xlu0 %258, %v36
  %v260 = vpop.permute.xlu0 %259
  %262 = vset.pattern.permute.xlu0 1
  %263 = vperm.xlu0 %262, %v37
  %v264 = vpop.permute.xlu0 %263
  %266 = vset.pattern.permute.xlu0 1
  %267 = vperm.xlu0 %266, %v38
  %v268 = vpop.permute.xlu0 %267
  %270 = vset.pattern.permute.xlu0 1
  %271 = vperm.xlu0 %270, %v39
  %v272 = vpop.permute.xlu0 %271
  %274 = vset.pattern.permute.xlu0 1
  %275 = vperm.xlu0 %274, %v40
  %v276 = vpop.permute.xlu0 %275
  %278 = vset.pattern.permute.xlu0 1
  %279 = vperm.xlu0 %278, %v41
  %v280 = vpop.permute.xlu0 %279
  %282 = vset.pattern.permute.xlu0 1
  %283 = vperm.xlu0 %282, %v42
  %v284 = vpop.permute.xlu0 %283
  %286 = vset.pattern.permute.xlu0 1
  %287 = vperm.xlu0 %286, %v43
  %v288 = vpop.permute.xlu0 %287
  %290 = vset.pattern.permute.xlu0 1
  %291 = vperm.xlu0 %290, %v44
  %v292 = vpop.permute.xlu0 %291
  %294 = vset.pattern.permute.xlu0 1
  %295 = vperm.xlu0 %294, %v45
  %v296 = vpop.permute.xlu0 %295
  %298 = vset.pattern.permute.xlu0 1
  %299 = vperm.xlu0 %298, %v46
  %v300 = vpop.permute.xlu0 %299
  %302 = vset.pattern.permute.xlu0 1
  %303 = vperm.xlu0 %302, %v47
  %v304 = vpop.permute.xlu0 %303
  %306 = vset.pattern.permute.xlu0 1
  %307 = vperm.xlu0 %306, %v48
  %v308 = vpop.permute.xlu0 %307
  %310 = vset.pattern.permute.xlu0 1
  %311 = vperm.xlu0 %310, %v49
  %v312 = vpop.permute.xlu0 %311
  %v314 = vlaneseq
  %v315 = vshrl.u32 %v314, 7
  %v316 = vsub.s32 1, %v315
  %v317 = vrot.slane %v23, %v316
  %v318 = vmul.f32 %v212, %v317
  %v319 = vmul.f32 %v216, %v317
  %v320 = vmul.f32 %v220, %v317
  %v321 = vmul.f32 %v224, %v317
  %v322 = vmul.f32 %v228, %v317
  %v323 = vmul.f32 %v232, %v317
  %v324 = vmul.f32 %v236, %v317
  %v325 = vmul.f32 %v240, %v317
  %v326 = vmul.f32 %v244, %v317
  %v327 = vmul.f32 %v248, %v317
  %v328 = vmul.f32 %v252, %v317
  %v329 = vmul.f32 %v256, %v317
  %v330 = vmul.f32 %v260, %v317
  %v331 = vmul.f32 %v264, %v317
  %v332 = vmul.f32 %v268, %v317
  %v333 = vmul.f32 %v272, %v317
  %v334 = vmul.f32 %v276, %v317
  %v335 = vmul.f32 %v280, %v317
  %v336 = vmul.f32 %v284, %v317
  %v337 = vmul.f32 %v288, %v317
  %v338 = vmul.f32 %v292, %v317
  %v339 = vmul.f32 %v296, %v317
  %v340 = vmul.f32 %v300, %v317
  %v341 = vmul.f32 %v304, %v317
  %v342 = vmul.f32 %v308, %v317
  %v343 = vmul.f32 %v312, %v317
  %v344 = vadd.f32 %v184, %v318
  %v345 = vadd.f32 %v185, %v319
  %v346 = vadd.f32 %v186, %v320
  %v347 = vadd.f32 %v187, %v321
  %v348 = vadd.f32 %v188, %v322
  %v349 = vadd.f32 %v189, %v323
  %v350 = vadd.f32 %v190, %v324
  %v351 = vadd.f32 %v191, %v325
  %v352 = vadd.f32 %v192, %v326
  %v353 = vadd.f32 %v193, %v327
  %v354 = vadd.f32 %v194, %v328
  %v355 = vadd.f32 %v195, %v329
  %v356 = vadd.f32 %v196, %v330
  %v357 = vadd.f32 %v197, %v331
  %v358 = vadd.f32 %v198, %v332
  %v359 = vadd.f32 %v199, %v333
  %v360 = vadd.f32 %v200, %v334
  %v361 = vadd.f32 %v201, %v335
  %v362 = vadd.f32 %v202, %v336
  %v363 = vadd.f32 %v203, %v337
  %v364 = vadd.f32 %v204, %v338
  %v365 = vadd.f32 %v205, %v339
  %v366 = vadd.f32 %v206, %v340
  %v367 = vadd.f32 %v207, %v341
  %v368 = vadd.f32 %v208, %v342
  %v369 = vadd.f32 %v209, %v343
  %v370 = vld [vmem:[%s2] sm:$0xff]
  %v371 = vld [vmem:[%s2 + $0x8] sm:$0xff]
  %v372 = vld [vmem:[%s2 + $0x10] sm:$0xff]
  %v373 = vld [vmem:[%s2 + $0x18] sm:$0xff]
  %v374 = vld [vmem:[%s2 + $0x20] sm:$0xff]
  %v375 = vld [vmem:[%s2 + $0x28] sm:$0xff]
  %v376 = vld [vmem:[%s2 + $0x30] sm:$0xff]
  %v377 = vld [vmem:[%s2 + $0x38] sm:$0xff]
  %v378 = vld [vmem:[%s2 + $0x40] sm:$0xff]
  %v379 = vld [vmem:[%s2 + $0x48] sm:$0xff]
  %v380 = vld [vmem:[%s2 + $0x50] sm:$0xff]
  %v381 = vld [vmem:[%s2 + $0x58] sm:$0xff]
  %v382 = vld [vmem:[%s2 + $0x60] sm:$0xff]
  %v383 = vld [vmem:[%s2 + $0x68] sm:$0xff]
  %v384 = vld [vmem:[%s2 + $0x70] sm:$0xff]
  %v385 = vld [vmem:[%s2 + $0x78] sm:$0xff]
  %v386 = vld [vmem:[%s2 + $0x80] sm:$0xff]
  %v387 = vld [vmem:[%s2 + $0x88] sm:$0xff]
  %v388 = vld [vmem:[%s2 + $0x90] sm:$0xff]
  %v389 = vld [vmem:[%s2 + $0x98] sm:$0xff]
  %v390 = vld [vmem:[%s2 + $0xa0] sm:$0xff]
  %v391 = vld [vmem:[%s2 + $0xa8] sm:$0xff]
  %v392 = vld [vmem:[%s2 + $0xb0] sm:$0xff]
  %v393 = vld [vmem:[%s2 + $0xb8] sm:$0xff]
  %v394 = vld [vmem:[%s2 + $0xc0] sm:$0xff]
  %v395 = vld [vmem:[%s2 + $0xc8] sm:$0xff]
  %397 = vset.pattern.permute.xlu0 0
  %398 = vperm.xlu0 %397, %v370
  %v399 = vpop.permute.xlu0 %398
  %402 = vset.pattern.permute.xlu0 0
  %403 = vperm.xlu0 %402, %v371
  %v404 = vpop.permute.xlu0 %403
  %407 = vset.pattern.permute.xlu0 0
  %408 = vperm.xlu0 %407, %v372
  %v409 = vpop.permute.xlu0 %408
  %412 = vset.pattern.permute.xlu0 0
  %413 = vperm.xlu0 %412, %v373
  %v414 = vpop.permute.xlu0 %413
  %417 = vset.pattern.permute.xlu0 0
  %418 = vperm.xlu0 %417, %v374
  %v419 = vpop.permute.xlu0 %418
  %422 = vset.pattern.permute.xlu0 0
  %423 = vperm.xlu0 %422, %v375
  %v424 = vpop.permute.xlu0 %423
  %427 = vset.pattern.permute.xlu0 0
  %428 = vperm.xlu0 %427, %v376
  %v429 = vpop.permute.xlu0 %428
  %432 = vset.pattern.permute.xlu0 0
  %433 = vperm.xlu0 %432, %v377
  %v434 = vpop.permute.xlu0 %433
  %437 = vset.pattern.permute.xlu0 0
  %438 = vperm.xlu0 %437, %v378
  %v439 = vpop.permute.xlu0 %438
  %442 = vset.pattern.permute.xlu0 0
  %443 = vperm.xlu0 %442, %v379
  %v444 = vpop.permute.xlu0 %443
  %447 = vset.pattern.permute.xlu0 0
  %448 = vperm.xlu0 %447, %v380
  %v449 = vpop.permute.xlu0 %448
  %452 = vset.pattern.permute.xlu0 0
  %453 = vperm.xlu0 %452, %v381
  %v454 = vpop.permute.xlu0 %453
  %457 = vset.pattern.permute.xlu0 0
  %458 = vperm.xlu0 %457, %v382
  %v459 = vpop.permute.xlu0 %458
  %462 = vset.pattern.permute.xlu0 0
  %463 = vperm.xlu0 %462, %v383
  %v464 = vpop.permute.xlu0 %463
  %467 = vset.pattern.permute.xlu0 0
  %468 = vperm.xlu0 %467, %v384
  %v469 = vpop.permute.xlu0 %468
  %472 = vset.pattern.permute.xlu0 0
  %473 = vperm.xlu0 %472, %v385
  %v474 = vpop.permute.xlu0 %473
  %477 = vset.pattern.permute.xlu0 0
  %478 = vperm.xlu0 %477, %v386
  %v479 = vpop.permute.xlu0 %478
  %482 = vset.pattern.permute.xlu0 0
  %483 = vperm.xlu0 %482, %v387
  %v484 = vpop.permute.xlu0 %483
  %487 = vset.pattern.permute.xlu0 0
  %488 = vperm.xlu0 %487, %v388
  %v489 = vpop.permute.xlu0 %488
  %492 = vset.pattern.permute.xlu0 0
  %493 = vperm.xlu0 %492, %v389
  %v494 = vpop.permute.xlu0 %493
  %497 = vset.pattern.permute.xlu0 0
  %498 = vperm.xlu0 %497, %v390
  %v499 = vpop.permute.xlu0 %498
  %502 = vset.pattern.permute.xlu0 0
  %503 = vperm.xlu0 %502, %v391
  %v504 = vpop.permute.xlu0 %503
  %507 = vset.pattern.permute.xlu0 0
  %508 = vperm.xlu0 %507, %v392
  %v509 = vpop.permute.xlu0 %508
  %512 = vset.pattern.permute.xlu0 0
  %513 = vperm.xlu0 %512, %v393
  %v514 = vpop.permute.xlu0 %513
  %517 = vset.pattern.permute.xlu0 0
  %518 = vperm.xlu0 %517, %v394
  %v519 = vpop.permute.xlu0 %518
  %522 = vset.pattern.permute.xlu0 0
  %523 = vperm.xlu0 %522, %v395
  %v524 = vpop.permute.xlu0 %523
  %v526 = vadd.f32 %v344, %v399
  %v527 = vadd.f32 %v345, %v404
  %v528 = vadd.f32 %v346, %v409
  %v529 = vadd.f32 %v347, %v414
  %v530 = vadd.f32 %v348, %v419
  %v531 = vadd.f32 %v349, %v424
  %v532 = vadd.f32 %v350, %v429
  %v533 = vadd.f32 %v351, %v434
  %v534 = vadd.f32 %v352, %v439
  %v535 = vadd.f32 %v353, %v444
  %v536 = vadd.f32 %v354, %v449
  %v537 = vadd.f32 %v355, %v454
  %v538 = vadd.f32 %v356, %v459
  %v539 = vadd.f32 %v357, %v464
  %v540 = vadd.f32 %v358, %v469
  %v541 = vadd.f32 %v359, %v474
  %v542 = vadd.f32 %v360, %v479
  %v543 = vadd.f32 %v361, %v484
  %v544 = vadd.f32 %v362, %v489
  %v545 = vadd.f32 %v363, %v494
  %v546 = vadd.f32 %v364, %v499
  %v547 = vadd.f32 %v365, %v504
  %v548 = vadd.f32 %v366, %v509
  %v549 = vadd.f32 %v367, %v514
  %v550 = vadd.f32 %v368, %v519
  %v551 = vadd.f32 %v369, %v524
  %v552 = vmax.f32 %v526, 0.0
  %v553 = vmax.f32 %v527, 0.0
  %v554 = vmax.f32 %v528, 0.0
  %v555 = vmax.f32 %v529, 0.0
  %v556 = vmax.f32 %v530, 0.0
  %v557 = vmax.f32 %v531, 0.0
  %v558 = vmax.f32 %v532, 0.0
  %v559 = vmax.f32 %v533, 0.0
  %v560 = vmax.f32 %v534, 0.0
  %v561 = vmax.f32 %v535, 0.0
  %v562 = vmax.f32 %v536, 0.0
  %v563 = vmax.f32 %v537, 0.0
  %v564 = vmax.f32 %v538, 0.0
  %v565 = vmax.f32 %v539, 0.0
  %v566 = vmax.f32 %v540, 0.0
  %v567 = vmax.f32 %v541, 0.0
  %v568 = vmax.f32 %v542, 0.0
  %v569 = vmax.f32 %v543, 0.0
  %v570 = vmax.f32 %v544, 0.0
  %v571 = vmax.f32 %v545, 0.0
  %v572 = vmax.f32 %v546, 0.0
  %v573 = vmax.f32 %v547, 0.0
  %v574 = vmax.f32 %v548, 0.0
  %v575 = vmax.f32 %v549, 0.0
  %v576 = vmax.f32 %v550, 0.0
  %v577 = vmax.f32 %v551, 0.0
  %v578 = vand.u32 2147483647, %v526
  %v579 = vand.u32 2147483647, %v527
  %v580 = vand.u32 2147483647, %v528
  %v581 = vand.u32 2147483647, %v529
  %v582 = vand.u32 2147483647, %v530
  %v583 = vand.u32 2147483647, %v531
  %v584 = vand.u32 2147483647, %v532
  %v585 = vand.u32 2147483647, %v533
  %v586 = vand.u32 2147483647, %v534
  %v587 = vand.u32 2147483647, %v535
  %v588 = vand.u32 2147483647, %v536
  %v589 = vand.u32 2147483647, %v537
  %v590 = vand.u32 2147483647, %v538
  %v591 = vand.u32 2147483647, %v539
  %v592 = vand.u32 2147483647, %v540
  %v593 = vand.u32 2147483647, %v541
  %v594 = vand.u32 2147483647, %v542
  %v595 = vand.u32 2147483647, %v543
  %v596 = vand.u32 2147483647, %v544
  %v597 = vand.u32 2147483647, %v545
  %v598 = vand.u32 2147483647, %v546
  %v599 = vand.u32 2147483647, %v547
  %v600 = vand.u32 2147483647, %v548
  %v601 = vand.u32 2147483647, %v549
  %v602 = vand.u32 2147483647, %v550
  %v603 = vand.u32 2147483647, %v551
  %v604 = vsub.f32 0.0, %v578
  %v605 = vsub.f32 0.0, %v579
  %v606 = vsub.f32 0.0, %v580
  %v607 = vsub.f32 0.0, %v581
  %v608 = vsub.f32 0.0, %v582
  %v609 = vsub.f32 0.0, %v583
  %v610 = vsub.f32 0.0, %v584
  %v611 = vsub.f32 0.0, %v585
  %v612 = vsub.f32 0.0, %v586
  %v613 = vsub.f32 0.0, %v587
  %v614 = vsub.f32 0.0, %v588
  %v615 = vsub.f32 0.0, %v589
  %v616 = vsub.f32 0.0, %v590
  %v617 = vsub.f32 0.0, %v591
  %v618 = vsub.f32 0.0, %v592
  %v619 = vsub.f32 0.0, %v593
  %v620 = vsub.f32 0.0, %v594
  %v621 = vsub.f32 0.0, %v595
  %v622 = vsub.f32 0.0, %v596
  %v623 = vsub.f32 0.0, %v597
  %v624 = vsub.f32 0.0, %v598
  %v625 = vsub.f32 0.0, %v599
  %v626 = vsub.f32 0.0, %v600
  %v627 = vsub.f32 0.0, %v601
  %v628 = vsub.f32 0.0, %v602
  %v629 = vsub.f32 0.0, %v603
  %v630 = vmul.f32 %v604, 1.442695
  %v631 = vpow.pop %v630
  %v632 = vmul.f32 %v605, 1.442695
  %v633 = vpow.pop %v632
  %v634 = vmul.f32 %v606, 1.442695
  %v635 = vpow.pop %v634
  %v636 = vmul.f32 %v607, 1.442695
  %v637 = vpow.pop %v636
  %v638 = vmul.f32 %v608, 1.442695
  %v639 = vpow.pop %v638
  %v640 = vmul.f32 %v609, 1.442695
  %v641 = vpow.pop %v640
  %v642 = vmul.f32 %v610, 1.442695
  %v643 = vpow.pop %v642
  %v644 = vmul.f32 %v611, 1.442695
  %v645 = vpow.pop %v644
  %v646 = vmul.f32 %v612, 1.442695
  %v647 = vpow.pop %v646
  %v648 = vmul.f32 %v613, 1.442695
  %v649 = vpow.pop %v648
  %v650 = vmul.f32 %v614, 1.442695
  %v651 = vpow.pop %v650
  %v652 = vmul.f32 %v615, 1.442695
  %v653 = vpow.pop %v652
  %v654 = vmul.f32 %v616, 1.442695
  %v655 = vpow.pop %v654
  %v656 = vmul.f32 %v617, 1.442695
  %v657 = vpow.pop %v656
  %v658 = vmul.f32 %v618, 1.442695
  %v659 = vpow.pop %v658
  %v660 = vmul.f32 %v619, 1.442695
  %v661 = vpow.pop %v660
  %v662 = vmul.f32 %v620, 1.442695
  %v663 = vpow.pop %v662
  %v664 = vmul.f32 %v621, 1.442695
  %v665 = vpow.pop %v664
  %v666 = vmul.f32 %v622, 1.442695
  %v667 = vpow.pop %v666
  %v668 = vmul.f32 %v623, 1.442695
  %v669 = vpow.pop %v668
  %v670 = vmul.f32 %v624, 1.442695
  %v671 = vpow.pop %v670
  %v672 = vmul.f32 %v625, 1.442695
  %v673 = vpow.pop %v672
  %v674 = vmul.f32 %v626, 1.442695
  %v675 = vpow.pop %v674
  %v676 = vmul.f32 %v627, 1.442695
  %v677 = vpow.pop %v676
  %v678 = vmul.f32 %v628, 1.442695
  %v679 = vpow.pop %v678
  %v680 = vmul.f32 %v629, 1.442695
  %v681 = vpow.pop %v680
  %v682 = vadd.f32 %v631, 1.0
  %v683 = vlog2.pop %v682
  %v684 = vmul.f32 %v683, 0.6931472
  %v685 = vmul.f32 -0.5, %v631
  %v686 = vadd.f32 %v685, 1.0
  %v687 = vmul.f32 %v686, %v631
  %v688 = vand.u32 2147483647, %v631
  %vm689 = vcmp.lt.f32.partialorder %v688, 0.0004427343
  %v690 = vsel %vm689, %v687, %v684
  %v691 = vadd.f32 %v633, 1.0
  %v692 = vlog2.pop %v691
  %v693 = vmul.f32 %v692, 0.6931472
  %v694 = vmul.f32 -0.5, %v633
  %v695 = vadd.f32 %v694, 1.0
  %v696 = vmul.f32 %v695, %v633
  %v697 = vand.u32 2147483647, %v633
  %vm698 = vcmp.lt.f32.partialorder %v697, 0.0004427343
  %v699 = vsel %vm698, %v696, %v693
  %v700 = vadd.f32 %v635, 1.0
  %v701 = vlog2.pop %v700
  %v702 = vmul.f32 %v701, 0.6931472
  %v703 = vmul.f32 -0.5, %v635
  %v704 = vadd.f32 %v703, 1.0
  %v705 = vmul.f32 %v704, %v635
  %v706 = vand.u32 2147483647, %v635
  %vm707 = vcmp.lt.f32.partialorder %v706, 0.0004427343
  %v708 = vsel %vm707, %v705, %v702
  %v709 = vadd.f32 %v637, 1.0
  %v710 = vlog2.pop %v709
  %v711 = vmul.f32 %v710, 0.6931472
  %v712 = vmul.f32 -0.5, %v637
  %v713 = vadd.f32 %v712, 1.0
  %v714 = vmul.f32 %v713, %v637
  %v715 = vand.u32 2147483647, %v637
  %vm716 = vcmp.lt.f32.partialorder %v715, 0.0004427343
  %v717 = vsel %vm716, %v714, %v711
  %v718 = vadd.f32 %v639, 1.0
  %v719 = vlog2.pop %v718
  %v720 = vmul.f32 %v719, 0.6931472
  %v721 = vmul.f32 -0.5, %v639
  %v722 = vadd.f32 %v721, 1.0
  %v723 = vmul.f32 %v722, %v639
  %v724 = vand.u32 2147483647, %v639
  %vm725 = vcmp.lt.f32.partialorder %v724, 0.0004427343
  %v726 = vsel %vm725, %v723, %v720
  %v727 = vadd.f32 %v641, 1.0
  %v728 = vlog2.pop %v727
  %v729 = vmul.f32 %v728, 0.6931472
  %v730 = vmul.f32 -0.5, %v641
  %v731 = vadd.f32 %v730, 1.0
  %v732 = vmul.f32 %v731, %v641
  %v733 = vand.u32 2147483647, %v641
  %vm734 = vcmp.lt.f32.partialorder %v733, 0.0004427343
  %v735 = vsel %vm734, %v732, %v729
  %v736 = vadd.f32 %v643, 1.0
  %v737 = vlog2.pop %v736
  %v738 = vmul.f32 %v737, 0.6931472
  %v739 = vmul.f32 -0.5, %v643
  %v740 = vadd.f32 %v739, 1.0
  %v741 = vmul.f32 %v740, %v643
  %v742 = vand.u32 2147483647, %v643
  %vm743 = vcmp.lt.f32.partialorder %v742, 0.0004427343
  %v744 = vsel %vm743, %v741, %v738
  %v745 = vadd.f32 %v645, 1.0
  %v746 = vlog2.pop %v745
  %v747 = vmul.f32 %v746, 0.6931472
  %v748 = vmul.f32 -0.5, %v645
  %v749 = vadd.f32 %v748, 1.0
  %v750 = vmul.f32 %v749, %v645
  %v751 = vand.u32 2147483647, %v645
  %vm752 = vcmp.lt.f32.partialorder %v751, 0.0004427343
  %v753 = vsel %vm752, %v750, %v747
  %v754 = vadd.f32 %v647, 1.0
  %v755 = vlog2.pop %v754
  %v756 = vmul.f32 %v755, 0.6931472
  %v757 = vmul.f32 -0.5, %v647
  %v758 = vadd.f32 %v757, 1.0
  %v759 = vmul.f32 %v758, %v647
  %v760 = vand.u32 2147483647, %v647
  %vm761 = vcmp.lt.f32.partialorder %v760, 0.0004427343
  %v762 = vsel %vm761, %v759, %v756
  %v763 = vadd.f32 %v649, 1.0
  %v764 = vlog2.pop %v763
  %v765 = vmul.f32 %v764, 0.6931472
  %v766 = vmul.f32 -0.5, %v649
  %v767 = vadd.f32 %v766, 1.0
  %v768 = vmul.f32 %v767, %v649
  %v769 = vand.u32 2147483647, %v649
  %vm770 = vcmp.lt.f32.partialorder %v769, 0.0004427343
  %v771 = vsel %vm770, %v768, %v765
  %v772 = vadd.f32 %v651, 1.0
  %v773 = vlog2.pop %v772
  %v774 = vmul.f32 %v773, 0.6931472
  %v775 = vmul.f32 -0.5, %v651
  %v776 = vadd.f32 %v775, 1.0
  %v777 = vmul.f32 %v776, %v651
  %v778 = vand.u32 2147483647, %v651
  %vm779 = vcmp.lt.f32.partialorder %v778, 0.0004427343
  %v780 = vsel %vm779, %v777, %v774
  %v781 = vadd.f32 %v653, 1.0
  %v782 = vlog2.pop %v781
  %v783 = vmul.f32 %v782, 0.6931472
  %v784 = vmul.f32 -0.5, %v653
  %v785 = vadd.f32 %v784, 1.0
  %v786 = vmul.f32 %v785, %v653
  %v787 = vand.u32 2147483647, %v653
  %vm788 = vcmp.lt.f32.partialorder %v787, 0.0004427343
  %v789 = vsel %vm788, %v786, %v783
  %v790 = vadd.f32 %v655, 1.0
  %v791 = vlog2.pop %v790
  %v792 = vmul.f32 %v791, 0.6931472
  %v793 = vmul.f32 -0.5, %v655
  %v794 = vadd.f32 %v793, 1.0
  %v795 = vmul.f32 %v794, %v655
  %v796 = vand.u32 2147483647, %v655
  %vm797 = vcmp.lt.f32.partialorder %v796, 0.0004427343
  %v798 = vsel %vm797, %v795, %v792
  %v799 = vadd.f32 %v657, 1.0
  %v800 = vlog2.pop %v799
  %v801 = vmul.f32 %v800, 0.6931472
  %v802 = vmul.f32 -0.5, %v657
  %v803 = vadd.f32 %v802, 1.0
  %v804 = vmul.f32 %v803, %v657
  %v805 = vand.u32 2147483647, %v657
  %vm806 = vcmp.lt.f32.partialorder %v805, 0.0004427343
  %v807 = vsel %vm806, %v804, %v801
  %v808 = vadd.f32 %v659, 1.0
  %v809 = vlog2.pop %v808
  %v810 = vmul.f32 %v809, 0.6931472
  %v811 = vmul.f32 -0.5, %v659
  %v812 = vadd.f32 %v811, 1.0
  %v813 = vmul.f32 %v812, %v659
  %v814 = vand.u32 2147483647, %v659
  %vm815 = vcmp.lt.f32.partialorder %v814, 0.0004427343
  %v816 = vsel %vm815, %v813, %v810
  %v817 = vadd.f32 %v661, 1.0
  %v818 = vlog2.pop %v817
  %v819 = vmul.f32 %v818, 0.6931472
  %v820 = vmul.f32 -0.5, %v661
  %v821 = vadd.f32 %v820, 1.0
  %v822 = vmul.f32 %v821, %v661
  %v823 = vand.u32 2147483647, %v661
  %vm824 = vcmp.lt.f32.partialorder %v823, 0.0004427343
  %v825 = vsel %vm824, %v822, %v819
  %v826 = vadd.f32 %v663, 1.0
  %v827 = vlog2.pop %v826
  %v828 = vmul.f32 %v827, 0.6931472
  %v829 = vmul.f32 -0.5, %v663
  %v830 = vadd.f32 %v829, 1.0
  %v831 = vmul.f32 %v830, %v663
  %v832 = vand.u32 2147483647, %v663
  %vm833 = vcmp.lt.f32.partialorder %v832, 0.0004427343
  %v834 = vsel %vm833, %v831, %v828
  %v835 = vadd.f32 %v665, 1.0
  %v836 = vlog2.pop %v835
  %v837 = vmul.f32 %v836, 0.6931472
  %v838 = vmul.f32 -0.5, %v665
  %v839 = vadd.f32 %v838, 1.0
  %v840 = vmul.f32 %v839, %v665
  %v841 = vand.u32 2147483647, %v665
  %vm842 = vcmp.lt.f32.partialorder %v841, 0.0004427343
  %v843 = vsel %vm842, %v840, %v837
  %v844 = vadd.f32 %v667, 1.0
  %v845 = vlog2.pop %v844
  %v846 = vmul.f32 %v845, 0.6931472
  %v847 = vmul.f32 -0.5, %v667
  %v848 = vadd.f32 %v847, 1.0
  %v849 = vmul.f32 %v848, %v667
  %v850 = vand.u32 2147483647, %v667
  %vm851 = vcmp.lt.f32.partialorder %v850, 0.0004427343
  %v852 = vsel %vm851, %v849, %v846
  %v853 = vadd.f32 %v669, 1.0
  %v854 = vlog2.pop %v853
  %v855 = vmul.f32 %v854, 0.6931472
  %v856 = vmul.f32 -0.5, %v669
  %v857 = vadd.f32 %v856, 1.0
  %v858 = vmul.f32 %v857, %v669
  %v859 = vand.u32 2147483647, %v669
  %vm860 = vcmp.lt.f32.partialorder %v859, 0.0004427343
  %v861 = vsel %vm860, %v858, %v855
  %v862 = vadd.f32 %v671, 1.0
  %v863 = vlog2.pop %v862
  %v864 = vmul.f32 %v863, 0.6931472
  %v865 = vmul.f32 -0.5, %v671
  %v866 = vadd.f32 %v865, 1.0
  %v867 = vmul.f32 %v866, %v671
  %v868 = vand.u32 2147483647, %v671
  %vm869 = vcmp.lt.f32.partialorder %v868, 0.0004427343
  %v870 = vsel %vm869, %v867, %v864
  %v871 = vadd.f32 %v673, 1.0
  %v872 = vlog2.pop %v871
  %v873 = vmul.f32 %v872, 0.6931472
  %v874 = vmul.f32 -0.5, %v673
  %v875 = vadd.f32 %v874, 1.0
  %v876 = vmul.f32 %v875, %v673
  %v877 = vand.u32 2147483647, %v673
  %vm878 = vcmp.lt.f32.partialorder %v877, 0.0004427343
  %v879 = vsel %vm878, %v876, %v873
  %v880 = vadd.f32 %v675, 1.0
  %v881 = vlog2.pop %v880
  %v882 = vmul.f32 %v881, 0.6931472
  %v883 = vmul.f32 -0.5, %v675
  %v884 = vadd.f32 %v883, 1.0
  %v885 = vmul.f32 %v884, %v675
  %v886 = vand.u32 2147483647, %v675
  %vm887 = vcmp.lt.f32.partialorder %v886, 0.0004427343
  %v888 = vsel %vm887, %v885, %v882
  %v889 = vadd.f32 %v677, 1.0
  %v890 = vlog2.pop %v889
  %v891 = vmul.f32 %v890, 0.6931472
  %v892 = vmul.f32 -0.5, %v677
  %v893 = vadd.f32 %v892, 1.0
  %v894 = vmul.f32 %v893, %v677
  %v895 = vand.u32 2147483647, %v677
  %vm896 = vcmp.lt.f32.partialorder %v895, 0.0004427343
  %v897 = vsel %vm896, %v894, %v891
  %v898 = vadd.f32 %v679, 1.0
  %v899 = vlog2.pop %v898
  %v900 = vmul.f32 %v899, 0.6931472
  %v901 = vmul.f32 -0.5, %v679
  %v902 = vadd.f32 %v901, 1.0
  %v903 = vmul.f32 %v902, %v679
  %v904 = vand.u32 2147483647, %v679
  %vm905 = vcmp.lt.f32.partialorder %v904, 0.0004427343
  %v906 = vsel %vm905, %v903, %v900
  %v907 = vadd.f32 %v681, 1.0
  %v908 = vlog2.pop %v907
  %v909 = vmul.f32 %v908, 0.6931472
  %v910 = vmul.f32 -0.5, %v681
  %v911 = vadd.f32 %v910, 1.0
  %v912 = vmul.f32 %v911, %v681
  %v913 = vand.u32 2147483647, %v681
  %vm914 = vcmp.lt.f32.partialorder %v913, 0.0004427343
  %v915 = vsel %vm914, %v912, %v909
  %v916 = vadd.f32 %v552, %v690
  %v917 = vadd.f32 %v553, %v699
  %v918 = vadd.f32 %v554, %v708
  %v919 = vadd.f32 %v555, %v717
  %v920 = vadd.f32 %v556, %v726
  %v921 = vadd.f32 %v557, %v735
  %v922 = vadd.f32 %v558, %v744
  %v923 = vadd.f32 %v559, %v753
  %v924 = vadd.f32 %v560, %v762
  %v925 = vadd.f32 %v561, %v771
  %v926 = vadd.f32 %v562, %v780
  %v927 = vadd.f32 %v563, %v789
  %v928 = vadd.f32 %v564, %v798
  %v929 = vadd.f32 %v565, %v807
  %v930 = vadd.f32 %v566, %v816
  %v931 = vadd.f32 %v567, %v825
  %v932 = vadd.f32 %v568, %v834
  %v933 = vadd.f32 %v569, %v843
  %v934 = vadd.f32 %v570, %v852
  %v935 = vadd.f32 %v571, %v861
  %v936 = vadd.f32 %v572, %v870
  %v937 = vadd.f32 %v573, %v879
  %v938 = vadd.f32 %v574, %v888
  %v939 = vadd.f32 %v575, %v897
  %v940 = vadd.f32 %v576, %v906
  %v941 = vadd.f32 %v577, %v915
  %v942 = vpack.c.bf16 %v917, %v916
  %v943 = vpack.c.bf16 %v919, %v918
  %v944 = vpack.c.bf16 %v921, %v920
  %v945 = vpack.c.bf16 %v923, %v922
  %v946 = vpack.c.bf16 %v925, %v924
  %v947 = vpack.c.bf16 %v927, %v926
  %v948 = vpack.c.bf16 %v929, %v928
  %v949 = vpack.c.bf16 %v931, %v930
  %v950 = vpack.c.bf16 %v933, %v932
  %v951 = vpack.c.bf16 %v935, %v934
  %v952 = vpack.c.bf16 %v937, %v936
  %v953 = vpack.c.bf16 %v939, %v938
  %v954 = vpack.c.bf16 %v941, %v940
  %v955 = vld [vmem:[%s3] sm:$0x3]
  %v956 = vld [vmem:[#allocation2] sm:$0x1]
  %958 = vset.pattern.permute.xlu0 0
  %959 = vperm.xlu0 %958, %v956
  %v960 = vpop.permute.xlu0 %959
  %v962 = vlaneseq
  %v963 = vshrl.u32 %v962, 7
  %v964 = vsub.s32 0, %v963
  %v965 = vrot.slane %v960, %v964
  %v968 = vunpack.c.l.s4 1966171168
  %v969 = vunpack.c.0.s8 %v968
  %v970 = vlaneseq
  %v971 = vshrl.u32 %v970, 7
  %v972 = vsub.s32 %v969, %v971
  %v973 = vrot.slane %v955, %v972
  %v974 = vcombine.high %v973, %v973
  %v976 = vunpack.c.l.s4 1966171168
  %v977 = vunpack.c.0.s8 %v976
  %v978 = vlaneseq
  %v979 = vshrl.u32 %v978, 7
  %v980 = vsub.s32 %v977, %v979
  %v981 = vrot.slane %v973, %v980
  %v983 = vunpack.c.l.s4 1966171168
  %v984 = vunpack.c.0.s8 %v983
  %v985 = vlaneseq
  %v986 = vshrl.u32 %v985, 7
  %v987 = vsub.s32 %v984, %v986
  %v988 = vrot.slane %v974, %v987
  %vm990 = vcmask 654336
  %v992 = vsel %vm990, %v988, 0
  %994 = vmatprep.subr.bf16.mxu0 0
  %995 = vmatpush1.bf16.msra.mxu0 %v949
  %996 = vmatprep.subr.bf16.mxu0 0
  %997 = vmatpush1.bf16.msra.mxu0 %v948
  %998 = vmatprep.subr.bf16.mxu0 0
  %999 = vmatpush1.bf16.msra.mxu0 %v947
  %1000 = vmatprep.subr.bf16.mxu0 0
  %1001 = vmatpush1.bf16.msra.mxu0 %v946
  %1002 = vmatprep.subr.bf16.mxu0 0
  %1003 = vmatpush1.bf16.msra.mxu0 %v945
  %1004 = vmatprep.subr.bf16.mxu0 0
  %1005 = vmatpush1.bf16.msra.mxu0 %v944
  %1006 = vmatprep.subr.bf16.mxu0 0
  %1007 = vmatpush1.bf16.msra.mxu0 %v943
  %1008 = vmatprep.subr.bf16.mxu0 0
  %1009 = vmatpush1.bf16.msra.mxu0 %v942
  %1010 = vmatprep.subr.bf16.mxu0 0
  %1011 = vmatpush2.bf16.msra.mxu0 0
  %1012 = vmatprep.subr.bf16.mxu0 0
  %1013 = vmatpush2.bf16.msra.mxu0 0
  %1014 = vmatprep.subr.bf16.mxu0 0
  %1015 = vmatpush2.bf16.msra.mxu0 0
  %1016 = vmatprep.subr.bf16.mxu0 0
  %1017 = vmatpush2.bf16.msra.mxu0 %v954
  %1018 = vmatprep.subr.bf16.mxu0 0
  %1019 = vmatpush2.bf16.msra.mxu0 %v953
  %1020 = vmatprep.subr.bf16.mxu0 0
  %1021 = vmatpush2.bf16.msra.mxu0 %v952
  %1022 = vmatprep.subr.bf16.mxu0 0
  %1023 = vmatpush2.bf16.msra.mxu0 %v951
  %1024 = vmatprep.subr.bf16.mxu0 0
  %1025 = vmatpush2.bf16.msra.mxu0 %v950
  %1026 = vmatprep.mubr.bf16.mxu0 %v992
  %1027 = vmatmul.mubr.bf16.gmra.mxu0 %v981
  %v1028 = vpop.f32.mrf.mxu0
  %v1029 = vadd.f32 %v965, %v1028
  %v1030 = vpop.f32.mrf.mxu0
  %v1031 = vpop.f32.mrf.mxu0
  %v1032 = vpop.f32.mrf.mxu0
  %1033 = vdwg.mxu0
  %v1034 = vmax.f32 %v1029, 0.0
  %v1035 = vand.u32 2147483647, %v1029
  %v1036 = vsub.f32 0.0, %v1035
  %v1037 = vmul.f32 %v1036, 1.442695
  %v1038 = vpow.pop %v1037
  %v1039 = vadd.f32 %v1038, 1.0
  %v1040 = vlog2.pop %v1039
  %v1041 = vmul.f32 %v1040, 0.6931472
  %v1042 = vmul.f32 -0.5, %v1038
  %v1043 = vadd.f32 %v1042, 1.0
  %v1044 = vmul.f32 %v1043, %v1038
  %v1045 = vand.u32 2147483647, %v1038
  %vm1046 = vcmp.lt.f32.partialorder %v1045, 0.0004427343
  %v1047 = vsel %vm1046, %v1044, %v1041
  %v1048 = vadd.f32 %v1034, %v1047
  %1049 = vst [vmem:[%s5] sm:$0x1] %v1048
  // Predicated region
  $region22: #{_mlp_forward_impl.1} parent=0 // pred_check
    _
  $region23: #{_mlp_forward_impl.1} parent=0 // pred_check_branch
    %1051 = sbr.rel (0) target = $region25
  $region24: #{_mlp_forward_impl.1} parent=0 // pred_region
    _
  $region25: #{_mlp_forward_impl.1} parent=0 // pred_fallthru
    _
  // Predicated region
  $region26: #{_mlp_forward_impl.1} parent=0 // pred_check
    _
  $region27: #{_mlp_forward_impl.1} parent=0 // pred_check_branch
    %1053 = sbr.rel (0) target = $region29
  $region28: #{_mlp_forward_impl.1} parent=0 // pred_region
    _
  $region29: #{_mlp_forward_impl.1} parent=0 // pred_fallthru
    _

</llo_original>
